<compile_context>
chip_gen: v7x
topology: tpu7x:2x2x1
jax: 0.10.0
libtpu: 0.0.40
codegen_flags: <defaults>
</compile_context>

<pallas_src>
import jax
import jax.numpy as jnp
from jax.experimental import pallas as pl
from jax.experimental.pallas import tpu as pltpu


def stochastic_head_kernel(x_ref, w1_ref, b1_ref, w2_ref, b2_ref, y_ref):
    # net: Linear -> ReLU -> Linear -> ReLU  (MXU matmuls, f32 accumulation)
    x = x_ref[...].astype(w1_ref.dtype)                       # MXU-native dtype
    h1 = jnp.dot(x, w1_ref[...], preferred_element_type=jnp.float32)
    h1 = jnp.maximum(h1 + b1_ref[...].astype(jnp.float32), 0.0)
    h2 = jnp.dot(h1.astype(w2_ref.dtype), w2_ref[...],
                 preferred_element_type=jnp.float32)
    y = jnp.maximum(h2 + b2_ref[...].astype(jnp.float32), 0.0)
    y_ref[...] = y.astype(y_ref.dtype)
    # TODO(synk): critic(y) and DiagGaussian(y) are computed-then-discarded in
    # the torch forward(); intentionally omitted (dead code for the output).


def _round_up(v, m):
    return ((v + m - 1) // m) * m


def stochastic_head_forward(x, params, *, tb=512, min_grid_steps=1, out_dtype=None):
    """StochasticHead forward. Returns y, matching the torch module's return value.

    tb:            target batch-tile size (rows per grid step).
    min_grid_steps: set to 2 on v7x so both TensorCores get a grid step.
    out_dtype:     optionally emit y in a narrower dtype (e.g. bf16) to halve
                   writeback bytes; defaults to x.dtype.
    """
    B, in_size = x.shape
    H = params["w1"].shape[1]
    out_dtype = out_dtype if out_dtype is not None else x.dtype

    # Sublane packing: 8 rows for 32-bit, 16 for 16-bit, 32 for 8-bit.
    sublane = 8 * (4 // jnp.dtype(x.dtype).itemsize)

    # Batch tile: either the full batch (always a legal block layout) or a
    # sublane-aligned tile; Pallas masks the (rare) partial tail tile.
    if B <= tb and min_grid_steps <= 1:
        TB = B
    else:
        steps = max(min_grid_steps, pl.cdiv(B, tb))
        TB = min(B, _round_up(pl.cdiv(B, steps), sublane))
    grid = (pl.cdiv(B, TB),)

    # Explicit scoped-VMEM budget: double-buffered streamed x/y, single-buffered
    # resident weights/biases, the f32 h1 intermediate, +25% headroom.
    x_tile_bytes = TB * in_size * jnp.dtype(x.dtype).itemsize
    y_tile_bytes = TB * H * jnp.dtype(out_dtype).itemsize
    w_bytes = sum(int(params[k].size) * jnp.dtype(params[k].dtype).itemsize
                  for k in ("w1", "b1", "w2", "b2"))
    h1_bytes = TB * H * 4
    vmem_bytes = int(1.25 * (2 * x_tile_bytes + 2 * y_tile_bytes + w_bytes + h1_bytes))
    vmem_bytes = min(max(vmem_bytes + (2 << 20), 4 << 20), 64 << 20)  # v7x-safe cap

    def resident(shape):
        # Constant index_map + single buffering: DMA once, stay VMEM-resident.
        return pl.BlockSpec(shape, lambda i: (0,) * len(shape),
                            pipeline_mode=pl.Buffered(1))

    y = pl.pallas_call(
        stochastic_head_kernel,
        out_shape=jax.ShapeDtypeStruct((B, H), out_dtype),
        grid=grid,
        in_specs=[
            pl.BlockSpec((TB, in_size), lambda i: (i, 0)),   # x: streamed per tile
            resident(params["w1"].shape),
            resident(params["b1"].shape),
            resident(params["w2"].shape),
            resident(params["b2"].shape),
        ],
        out_specs=pl.BlockSpec((TB, H), lambda i: (i, 0)),
        compiler_params=pltpu.CompilerParams(
            dimension_semantics=("parallel",),               # v7x: shard batch over 2 TCs
            vmem_limit_bytes=vmem_bytes,
        ),
    )(
        x,
        params["w1"], params["b1"],
        params["w2"], params["b2"],
    )
    return y


def init_params(key, input_size, hidden_size, dtype=jnp.float32):
    # On v6e/v7x prefer dtype=jnp.bfloat16 (MXU-native, half the VMEM/DMA);
    # accumulation stays f32 inside the kernel either way.
    ks = jax.random.split(key, 4)
    scale = 0.02
    return {
        "w1": (scale * jax.random.normal(ks[0], (input_size, hidden_size))).astype(dtype),
        "b1": (scale * jax.random.normal(ks[1], (1, hidden_size))).astype(dtype),
        "w2": (scale * jax.random.normal(ks[2], (hidden_size, hidden_size))).astype(dtype),
        "b2": (scale * jax.random.normal(ks[3], (1, hidden_size))).astype(dtype),
    }


if __name__ == "__main__":
    key = jax.random.PRNGKey(0)
    k_x, k_p = jax.random.split(key)

    batch = 32
    input_size = 64
    hidden_size = 128   # lane-dense (multiple of 128); small stand-in for the default 1024

    x = jax.random.normal(k_x, (batch, input_size), jnp.float32)
    params = init_params(k_p, input_size, hidden_size, dtype=jnp.float32)

    # tb=16, min_grid_steps=2 -> TB=16, grid of 2 steps: exercises the sublane-
    # aligned batch tiling and the two-TensorCore ("parallel") grid path.
    y = stochastic_head_forward(x, params, tb=16, min_grid_steps=2)
    jax.block_until_ready(y)

    # Sanity check against pure-JAX reference of the torch net.
    h1_ref = jnp.maximum(x @ params["w1"] + params["b1"], 0.0)
    y_ref = jnp.maximum(h1_ref @ params["w2"] + params["b2"], 0.0)
    assert y.shape == (batch, hidden_size)
    assert jnp.allclose(y, y_ref, atol=1e-5, rtol=1e-5)

    print("KERNEL_OK")
</pallas_src>

<mosaic_0001>
module attributes {stable_mosaic.version = 11 : i64} {
  func.func @stochastic_head_kernel(%arg0: i32, %arg1: memref<16x64xf32, #tpu.memory_space<vmem>>, %arg2: memref<64x128xf32, #tpu.memory_space<vmem>>, %arg3: memref<1x128xf32, #tpu.memory_space<vmem>>, %arg4: memref<128x128xf32, #tpu.memory_space<vmem>>, %arg5: memref<1x128xf32, #tpu.memory_space<vmem>>, %arg6: memref<16x128xf32, #tpu.memory_space<vmem>>) attributes {dimension_semantics = [#tpu.dimension_semantics<parallel>], iteration_bounds = array<i64: 2>, scalar_prefetch = 0 : i64, scratch_operands = 0 : i64, tpu.core_type = #tpu.core_type<tc>, window_params = [{transform_indices = @transform_0, window_bounds = array<i64: 16, 64>}, {pipeline_mode = #tpu.pipeline_mode<synchronous>, transform_indices = @transform_1, window_bounds = array<i64: 64, 128>}, {pipeline_mode = #tpu.pipeline_mode<synchronous>, transform_indices = @transform_2, window_bounds = array<i64: 1, 128>}, {pipeline_mode = #tpu.pipeline_mode<synchronous>, transform_indices = @transform_3, window_bounds = array<i64: 128, 128>}, {pipeline_mode = #tpu.pipeline_mode<synchronous>, transform_indices = @transform_4, window_bounds = array<i64: 1, 128>}, {transform_indices = @transform_5, window_bounds = array<i64: 16, 128>}]} {
    %c0 = arith.constant 0 : index
    %c0_0 = arith.constant 0 : index
    %0 = vector.load %arg1[%c0, %c0_0] : memref<16x64xf32, #tpu.memory_space<vmem>>, vector<16x64xf32>
    %c0_1 = arith.constant 0 : index
    %c0_2 = arith.constant 0 : index
    %1 = vector.load %arg2[%c0_1, %c0_2] : memref<64x128xf32, #tpu.memory_space<vmem>>, vector<64x128xf32>
    %cst = arith.constant dense<0.000000e+00> : vector<16x128xf32>
    %2 = tpu.matmul %0, %1, %cst {dimension_numbers = #tpu.dot_dimension_numbers<[1], [0], [0], [1], [0, 0, 1, 1], [], []>} : vector<16x64xf32>, vector<64x128xf32>, vector<16x128xf32> -> vector<16x128xf32>
    %c0_3 = arith.constant 0 : index
    %c0_4 = arith.constant 0 : index
    %3 = vector.load %arg3[%c0_3, %c0_4] : memref<1x128xf32, #tpu.memory_space<vmem>>, vector<1x128xf32>
    %4 = vector.broadcast %3 : vector<1x128xf32> to vector<16x128xf32>
    %5 = arith.addf %2, %4 : vector<16x128xf32>
    %cst_5 = arith.constant 0.000000e+00 : f32
    %6 = vector.broadcast %cst_5 : f32 to vector<16x128xf32>
    %7 = arith.maximumf %5, %6 : vector<16x128xf32>
    %c0_6 = arith.constant 0 : index
    %c0_7 = arith.constant 0 : index
    %8 = vector.load %arg4[%c0_6, %c0_7] : memref<128x128xf32, #tpu.memory_space<vmem>>, vector<128x128xf32>
    %cst_8 = arith.constant dense<0.000000e+00> : vector<16x128xf32>
    %9 = tpu.matmul %7, %8, %cst_8 {dimension_numbers = #tpu.dot_dimension_numbers<[1], [0], [0], [1], [0, 0, 1, 1], [], []>} : vector<16x128xf32>, vector<128x128xf32>, vector<16x128xf32> -> vector<16x128xf32>
    %c0_9 = arith.constant 0 : index
    %c0_10 = arith.constant 0 : index
    %10 = vector.load %arg5[%c0_9, %c0_10] : memref<1x128xf32, #tpu.memory_space<vmem>>, vector<1x128xf32>
    %11 = vector.broadcast %10 : vector<1x128xf32> to vector<16x128xf32>
    %12 = arith.addf %9, %11 : vector<16x128xf32>
    %cst_11 = arith.constant 0.000000e+00 : f32
    %13 = vector.broadcast %cst_11 : f32 to vector<16x128xf32>
    %14 = arith.maximumf %12, %13 : vector<16x128xf32>
    %c0_12 = arith.constant 0 : index
    %c0_13 = arith.constant 0 : index
    %15 = vector.load %arg6[%c0_12, %c0_13] : memref<16x128xf32, #tpu.memory_space<vmem>>, vector<16x128xf32>
    tpu.vector_store %arg6[%c0_12, %c0_13], %14 {strides = array<i32>} : memref<16x128xf32, #tpu.memory_space<vmem>>, vector<16x128xf32>,
    return
  }
  func.func @transform_0(%arg0: i32) -> (i32, i32) {
    %c0_i32 = arith.constant 0 : i32
    %c0_i32_0 = arith.constant 0 : i32
    return %arg0, %c0_i32 : i32, i32
  }
  func.func @transform_1(%arg0: i32) -> (i32, i32) {
    %c0_i32 = arith.constant 0 : i32
    %c0_i32_0 = arith.constant 0 : i32
    %c0_i32_1 = arith.constant 0 : i32
    return %c0_i32, %c0_i32_0 : i32, i32
  }
  func.func @transform_2(%arg0: i32) -> (i32, i32) {
    %c0_i32 = arith.constant 0 : i32
    %c0_i32_0 = arith.constant 0 : i32
    %c0_i32_1 = arith.constant 0 : i32
    return %c0_i32, %c0_i32_0 : i32, i32
  }
  func.func @transform_3(%arg0: i32) -> (i32, i32) {
    %c0_i32 = arith.constant 0 : i32
    %c0_i32_0 = arith.constant 0 : i32
    %c0_i32_1 = arith.constant 0 : i32
    return %c0_i32, %c0_i32_0 : i32, i32
  }
  func.func @transform_4(%arg0: i32) -> (i32, i32) {
    %c0_i32 = arith.constant 0 : i32
    %c0_i32_0 = arith.constant 0 : i32
    %c0_i32_1 = arith.constant 0 : i32
    return %c0_i32, %c0_i32_0 : i32, i32
  }
  func.func @transform_5(%arg0: i32) -> (i32, i32) {
    %c0_i32 = arith.constant 0 : i32
    %c0_i32_0 = arith.constant 0 : i32
    return %arg0, %c0_i32 : i32, i32
  }
}

</mosaic_0001>

<llo_original>
// kernel: tpu_custom_call.1
$region0: #{tpu_custom_call.1}
  #allocation0 [shape = 'u32[]', space=smem, size = 0x4, offset = 0x4, fixed_abs, tag = 'smem constant byte address 0x4 - core index']
  #allocation1 [shape = 'u32[144,128]{1,0:T(1,128)}', space=vmem, size = 0x12000, scoped, tag = 'internal scratch']
  %s0 = inlined_call_operand.hbm [shape: f32[32,64], index: 0, kind: input, shape index: {}]
  %s1 = inlined_call_operand.hbm [shape: f32[64,128], index: 1, kind: input, shape index: {}]
  %s2 = inlined_call_operand.vmem [shape: f32[1,128], index: 2, kind: input, shape index: {}]
  %s3 = inlined_call_operand.hbm [shape: f32[128,128], index: 3, kind: input, shape index: {}]
  %s4 = inlined_call_operand.vmem [shape: f32[1,128], index: 4, kind: input, shape index: {}]
  %s5 = inlined_call_operand.hbm [shape: f32[32,128], index: 5, kind: output, shape index: {}]
  %s6 = sld [smem:[#allocation0]]
  $region65: #{tpu_custom_call.1} parent=0
    _
  %s8 = ssub.s32 1, %s6
  %s9 = scalar_select 0, %s8, %s6
  $region1: #{tpu_custom_call.1} parent=0
    #allocation2 [shape = 'u8[16384]{0}', space=vmem, size = 0x4000, scoped, tag = 'input window, operand 0']
    #allocation3 [shape = 's32[2]{0}', space=sflag, size = 0x8, scoped, tag = 'scoped memory for tpu_custom_call.1']
    #allocation4 [shape = 's32[2]{0}', space=sflag, size = 0x8, scoped, tag = 'scoped memory for tpu_custom_call.1']
    #allocation5 [shape = 'u8[32768]{0}', space=vmem, size = 0x8000, scoped, tag = 'input window, operand 1, single buffered']
    #allocation6 [shape = 's32[1]{0}', space=sflag, size = 0x4, scoped, tag = 'scoped memory for tpu_custom_call.1']
    #allocation7 [shape = 'u8[65536]{0}', space=vmem, size = 0x10000, scoped, tag = 'input window, operand 3, single buffered']
    #allocation8 [shape = 'u8[16384]{0}', space=vmem, size = 0x4000, scoped, tag = 'output window, operand 0']
    %10 = vsyncpa [#allocation3], 0
    %s11 = scalar_lea.sflag [#allocation3], 1
    %12 = vsyncpa %s11, 0
    %13 = vsyncpa [#allocation6], 0
    %14 = vsyncpa [#allocation4], 0
    %s15 = scalar_lea.sflag [#allocation4], 1
    %16 = vsyncpa %s15, 0
    loop: start=0, step=1, limit=4
    $region2: #{tpu_custom_call.1} parent=1 // loop_pre_header
      _
    $region3: #{tpu_custom_call.1} parent=1 // loop_header
      %s18 = sphi 0, %s22
      %p19 = scmp.ge.s32.totalorder %s18, 4
      %s28 = sphi 0, %s30
      %s31 = sphi 0, %s28
      %s32 = sphi 0, %s31
      %s48 = sphi 0, %s32
      %s52 = sphi 0, %s52
      %s54 = sphi 0, %s52
      %s55 = sphi 0, %s54
      %s69 = sphi 0, %s55
      %s73 = sphi 0, %s73
      %s75 = sphi 0, %s73
      %s76 = sphi 0, %s75
      %s90 = sphi 0, %s76
      %s94 = sphi 0, %s94
      %s96 = sphi 0, %s94
      %s97 = sphi 0, %s96
      %s111 = sphi 0, %s97
      %s115 = sphi 0, %s115
      %s117 = sphi 0, %s115
      %s118 = sphi 0, %s117
      %s132 = sphi 0, %s118
      %s138 = sphi 0, %s140
      %s141 = sphi 0, %s138
      %s142 = sphi 0, %s141
      %s158 = sphi 0, %s142
    $region4: #{tpu_custom_call.1} parent=1 // loop_header_branch
      %21 = sbr.rel (%p19) target = $region8
    $region5: #{tpu_custom_call.1} parent=1 // loop_body
      %s23 = ssub.s32 %s18, 1
      %s24 = ssub.s32 %s18, 2
      %s25 = sadd.s32 %s18, 1
      %s26 = ssub.s32 %s18, %s25
      %p27 = scmp.eq.s32.totalorder %s26, 0
      %s29 = sadd.s32 %s28, 1
      %s30 = scalar_select %p27, %s28, %s29
      %p33 = pneg %p27
      %p34 = scmp.eq.s32.totalorder %s18, 1
      %p35 = por %p33, %p34
      %p36 = scmp.ne.s32.totalorder %s28, %s31
      %p37 = scmp.eq.s32.totalorder %s18, 0
      %p38 = por %p36, %p37
      %p39 = scmp.ne.s32.totalorder %s28, %s31
      %p40 = scmp.eq.s32.totalorder %s23, 1
      %p41 = por %p39, %p40
      %p42 = scmp.ne.s32.totalorder %s31, %s32
      %p43 = scmp.eq.s32.totalorder %s23, 0
      %p44 = por %p42, %p43
      %p45 = scmp.ne.s32.totalorder %s31, %s32
      %p46 = scmp.eq.s32.totalorder %s24, 1
      %p47 = por %p45, %p46
      %p49 = scmp.ne.s32.totalorder %s32, %s48
      %p50 = scmp.eq.s32.totalorder %s24, 0
      %p51 = por %p49, %p50
      %s53 = sadd.s32 %s52, 1
      %p56 = scmp.eq.s32.totalorder %s18, 1
      %p57 = scmp.ne.s32.totalorder %s52, %s54
      %p58 = scmp.eq.s32.totalorder %s18, 0
      %p59 = por %p57, %p58
      %p60 = scmp.ne.s32.totalorder %s52, %s54
      %p61 = scmp.eq.s32.totalorder %s23, 1
      %p62 = por %p60, %p61
      %p63 = scmp.ne.s32.totalorder %s54, %s55
      %p64 = scmp.eq.s32.totalorder %s23, 0
      %p65 = por %p63, %p64
      %p66 = scmp.ne.s32.totalorder %s54, %s55
      %p67 = scmp.eq.s32.totalorder %s24, 1
      %p68 = por %p66, %p67
      %p70 = scmp.ne.s32.totalorder %s55, %s69
      %p71 = scmp.eq.s32.totalorder %s24, 0
      %p72 = por %p70, %p71
      %s74 = sadd.s32 %s73, 1
      %p77 = scmp.eq.s32.totalorder %s18, 1
      %p78 = scmp.ne.s32.totalorder %s73, %s75
      %p79 = scmp.eq.s32.totalorder %s18, 0
      %p80 = por %p78, %p79
      %p81 = scmp.ne.s32.totalorder %s73, %s75
      %p82 = scmp.eq.s32.totalorder %s23, 1
      %p83 = por %p81, %p82
      %p84 = scmp.ne.s32.totalorder %s75, %s76
      %p85 = scmp.eq.s32.totalorder %s23, 0
      %p86 = por %p84, %p85
      %p87 = scmp.ne.s32.totalorder %s75, %s76
      %p88 = scmp.eq.s32.totalorder %s24, 1
      %p89 = por %p87, %p88
      %p91 = scmp.ne.s32.totalorder %s76, %s90
      %p92 = scmp.eq.s32.totalorder %s24, 0
      %p93 = por %p91, %p92
      %s95 = sadd.s32 %s94, 1
      %p98 = scmp.eq.s32.totalorder %s18, 1
      %p99 = scmp.ne.s32.totalorder %s94, %s96
      %p100 = scmp.eq.s32.totalorder %s18, 0
      %p101 = por %p99, %p100
      %p102 = scmp.ne.s32.totalorder %s94, %s96
      %p103 = scmp.eq.s32.totalorder %s23, 1
      %p104 = por %p102, %p103
      %p105 = scmp.ne.s32.totalorder %s96, %s97
      %p106 = scmp.eq.s32.totalorder %s23, 0
      %p107 = por %p105, %p106
      %p108 = scmp.ne.s32.totalorder %s96, %s97
      %p109 = scmp.eq.s32.totalorder %s24, 1
      %p110 = por %p108, %p109
      %p112 = scmp.ne.s32.totalorder %s97, %s111
      %p113 = scmp.eq.s32.totalorder %s24, 0
      %p114 = por %p112, %p113
      %s116 = sadd.s32 %s115, 1
      %p119 = scmp.eq.s32.totalorder %s18, 1
      %p120 = scmp.ne.s32.totalorder %s115, %s117
      %p121 = scmp.eq.s32.totalorder %s18, 0
      %p122 = por %p120, %p121
      %p123 = scmp.ne.s32.totalorder %s115, %s117
      %p124 = scmp.eq.s32.totalorder %s23, 1
      %p125 = por %p123, %p124
      %p126 = scmp.ne.s32.totalorder %s117, %s118
      %p127 = scmp.eq.s32.totalorder %s23, 0
      %p128 = por %p126, %p127
      %p129 = scmp.ne.s32.totalorder %s117, %s118
      %p130 = scmp.eq.s32.totalorder %s24, 1
      %p131 = por %p129, %p130
      %p133 = scmp.ne.s32.totalorder %s118, %s132
      %p134 = scmp.eq.s32.totalorder %s24, 0
      %p135 = por %p133, %p134
      %s136 = ssub.s32 %s18, %s25
      %p137 = scmp.eq.s32.totalorder %s136, 0
      %s139 = sadd.s32 %s138, 1
      %s140 = scalar_select %p137, %s138, %s139
      %p143 = pneg %p137
      %p144 = scmp.eq.s32.totalorder %s18, 1
      %p145 = por %p143, %p144
      %p146 = scmp.ne.s32.totalorder %s138, %s141
      %p147 = scmp.eq.s32.totalorder %s18, 0
      %p148 = por %p146, %p147
      %p149 = scmp.ne.s32.totalorder %s138, %s141
      %p150 = scmp.eq.s32.totalorder %s23, 1
      %p151 = por %p149, %p150
      %p152 = scmp.ne.s32.totalorder %s141, %s142
      %p153 = scmp.eq.s32.totalorder %s23, 0
      %p154 = por %p152, %p153
      %p155 = scmp.ne.s32.totalorder %s141, %s142
      %p156 = scmp.eq.s32.totalorder %s24, 1
      %p157 = por %p155, %p156
      %p159 = scmp.ne.s32.totalorder %s142, %s158
      %p160 = scmp.eq.s32.totalorder %s24, 0
      %p161 = por %p159, %p160
      %p162 = scmp.le.s32.totalorder 1, %s18
      %p163 = scmp.lt.s32.totalorder %s18, 3
      %p164 = pnand %p162, %p163
      %p165 = pneg %p164
      // Predicated region
      $region9: #{tpu_custom_call.1} parent=5 // pred_check
        _
      $region10: #{tpu_custom_call.1} parent=5 // pred_check_branch
        %167 = sbr.rel (%p164) target = $region12
      $region11: #{tpu_custom_call.1} parent=5 // pred_region
        %s168 = ssub.s32 %s18, 1
        // Predicated region
        $region13: #{tpu_custom_call.1} parent=11 // pred_check
          %p169 = pneg %p65
        $region14: #{tpu_custom_call.1} parent=11 // pred_check_branch
          %171 = sbr.rel (%p169) target = $region16
        $region15: #{tpu_custom_call.1} parent=11 // pred_region
          %s173 = ssub.s32 1024, 1024
          %174 = vsyncadd [#allocation6], %s173
          %s175 = sshll.u32 [#allocation5], 4
          %s176 = int_to_ptr.vmem [resolvable:$true] %s175
          %181 = dma.hbm_to_vmem [thread:$0]  %s1, 1024, %s176, [#allocation6], 128, 128, 8
        $region16: #{tpu_custom_call.1} parent=11 // pred_fallthru
          _
        // Predicated region
        $region17: #{tpu_custom_call.1} parent=11 // pred_check
          %p182 = pneg %p86
        $region18: #{tpu_custom_call.1} parent=11 // pred_check_branch
          %184 = sbr.rel (%p182) target = $region20
        $region19: #{tpu_custom_call.1} parent=11 // pred_region
          _
        $region20: #{tpu_custom_call.1} parent=11 // pred_fallthru
          _
        // Predicated region
        $region21: #{tpu_custom_call.1} parent=11 // pred_check
          %p185 = pneg %p107
        $region22: #{tpu_custom_call.1} parent=11 // pred_check_branch
          %187 = sbr.rel (%p185) target = $region24
        $region23: #{tpu_custom_call.1} parent=11 // pred_region
          %s189 = ssub.s32 2048, 2048
          %190 = vsyncadd [#allocation6], %s189
          %s191 = sshll.u32 [#allocation7], 4
          %s192 = int_to_ptr.vmem [resolvable:$true] %s191
          %197 = dma.hbm_to_vmem [thread:$0]  %s3, 2048, %s192, [#allocation6], 128, 128, 8
        $region24: #{tpu_custom_call.1} parent=11 // pred_fallthru
          _
        // Predicated region
        $region25: #{tpu_custom_call.1} parent=11 // pred_check
          %p198 = pneg %p128
        $region26: #{tpu_custom_call.1} parent=11 // pred_check_branch
          %200 = sbr.rel (%p198) target = $region28
        $region27: #{tpu_custom_call.1} parent=11 // pred_region
          _
        $region28: #{tpu_custom_call.1} parent=11 // pred_fallthru
          _
      $region12: #{tpu_custom_call.1} parent=5 // pred_fallthru
        _
      %p201 = scmp.lt.s32.totalorder %s18, 2
      // Predicated region
      $region29: #{tpu_custom_call.1} parent=5 // pred_check
        %p202 = pneg %p201
      $region30: #{tpu_custom_call.1} parent=5 // pred_check_branch
        %204 = sbr.rel (%p202) target = $region32
      $region31: #{tpu_custom_call.1} parent=5 // pred_region
        // Predicated region
        $region33: #{tpu_custom_call.1} parent=31 // pred_check
          %p205 = pneg %p38
        $region34: #{tpu_custom_call.1} parent=31 // pred_check_branch
          %207 = sbr.rel (%p205) target = $region36
        $region35: #{tpu_custom_call.1} parent=31 // pred_region
          %s208 = sand.u32 %s28, 1
          %s209 = scalar_lea.sflag [#allocation3], %s208
          %s210 = sand.u32 %s28, 1
          %s211 = smul.addr %s210, 16
          %s212 = scalar_lea.vmem [#allocation2], %s211
          %s213 = smul.u32 2, %s18
          %s215 = ssub.s32 256, 256
          %216 = vsyncadd %s209, %s215
          %s217 = smul.addr %s213, 128
          %s218 = scalar_lea.hbm %s0, %s217
          %s219 = sshll.u32 %s212, 4
          %s220 = int_to_ptr.vmem [resolvable:$true] %s219
          %225 = dma.hbm_to_vmem [thread:$0]  %s218, 256, %s220, %s209, 128, 128, 8
        $region36: #{tpu_custom_call.1} parent=31 // pred_fallthru
          _
      $region32: #{tpu_custom_call.1} parent=5 // pred_fallthru
        _
      %p226 = scmp.le.s32.totalorder 1, %s18
      %p227 = scmp.lt.s32.totalorder %s18, 3
      %p228 = pnand %p226, %p227
      %p229 = pneg %p228
      // Predicated region
      $region37: #{tpu_custom_call.1} parent=5 // pred_check
        _
      $region38: #{tpu_custom_call.1} parent=5 // pred_check_branch
        %231 = sbr.rel (%p228) target = $region40
      $region39: #{tpu_custom_call.1} parent=5 // pred_region
        %s232 = ssub.s32 %s18, 1
        %s233 = sand.u32 %s31, 1
        %s234 = scalar_lea.sflag [#allocation3], %s233
        %s235 = sand.u32 %s31, 1
        %s236 = smul.addr %s235, 16
        %s237 = scalar_lea.vmem [#allocation2], %s236
        // Predicated region
        $region41: #{tpu_custom_call.1} parent=39 // pred_check
          %p238 = pneg %p44
        $region42: #{tpu_custom_call.1} parent=39 // pred_check_branch
          %240 = sbr.rel (%p238) target = $region44
        $region43: #{tpu_custom_call.1} parent=39 // pred_region
          %241 = dma.done %s234, 256
        $region44: #{tpu_custom_call.1} parent=39 // pred_fallthru
          _
        // Predicated region
        $region45: #{tpu_custom_call.1} parent=39 // pred_check
          %p242 = pneg %p65
        $region46: #{tpu_custom_call.1} parent=39 // pred_check_branch
          %244 = sbr.rel (%p242) target = $region48
        $region47: #{tpu_custom_call.1} parent=39 // pred_region
          %245 = dma.done [#allocation6], 1024
        $region48: #{tpu_custom_call.1} parent=39 // pred_fallthru
          _
        // Predicated region
        $region49: #{tpu_custom_call.1} parent=39 // pred_check
          %p246 = pneg %p107
        $region50: #{tpu_custom_call.1} parent=39 // pred_check_branch
          %248 = sbr.rel (%p246) target = $region52
        $region51: #{tpu_custom_call.1} parent=39 // pred_region
          %249 = dma.done [#allocation6], 2048
        $region52: #{tpu_custom_call.1} parent=39 // pred_fallthru
          _
        %s250 = sand.u32 %s31, 1
        %s251 = scalar_lea.sflag [#allocation3], %s250
        %s252 = sand.u32 %s31, 1
        %s253 = smul.addr %s252, 16
        %s254 = scalar_lea.vmem [#allocation2], %s253
        %p255 = pneg %p44
        %p256 = pneg %p41
        %p257 = pneg %p65
        %p258 = pneg %p62
        %p259 = pneg %p86
        %p260 = pneg %p83
        %p261 = pneg %p107
        %p262 = pneg %p104
        %p263 = pneg %p128
        %p264 = pneg %p125
        %p265 = pneg %p154
        %p266 = pneg %p151
        %s267 = sand.u32 %s141, 1
        %s268 = scalar_lea.sflag [#allocation4], %s267
        %s269 = sand.u32 %s141, 1
        %s270 = smul.addr %s269, 16
        %s271 = scalar_lea.vmem [#allocation8], %s270
        %s272 = smul.u32 2, %s23
        %s273 = smul.u32 2, %s23
        %v274 = vld [vmem:[%s237] sm:$0xff]
        %v275 = vld [vmem:[%s237 + $0x8] sm:$0xff]
        %v276 = vld [vmem:[#allocation5] sm:$0xff]
        %v277 = vld [vmem:[#allocation5 + $0x8] sm:$0xff]
        %v278 = vld [vmem:[#allocation5 + $0x10] sm:$0xff]
        %v279 = vld [vmem:[#allocation5 + $0x18] sm:$0xff]
        %v280 = vld [vmem:[#allocation5 + $0x20] sm:$0xff]
        %v281 = vld [vmem:[#allocation5 + $0x28] sm:$0xff]
        %v282 = vld [vmem:[#allocation5 + $0x30] sm:$0xff]
        %v283 = vld [vmem:[#allocation5 + $0x38] sm:$0xff]
        %v284 = vld [vmem:[%s2] sm:$0x1]
        %v286 = vlaneseq
        %v287 = vshrl.u32 %v286, 7
        %v288 = vsub.s32 0, %v287
        %v289 = vrot.slane %v284, %v288
        %vm291 = vcmask 523264
        %v293 = vsel %vm291, %v274, 0
        %v296 = vsel %vm291, %v275, 0
        %298 = vmatprep.subr.mxu0 0.0
        %299 = vmatpush1.msra.mxu0 %v276
        %300 = vmatprep.subr.mxu0 0.0
        %301 = vmatpush1.msra.mxu0 %v277
        %302 = vmatprep.subr.mxu0 0.0
        %303 = vmatpush1.msra.mxu0 %v278
        %304 = vmatprep.subr.mxu0 0.0
        %305 = vmatpush1.msra.mxu0 %v279
        %306 = vmatprep.subr.mxu0 0.0
        %307 = vmatpush1.msra.mxu0 %v280
        %308 = vmatprep.subr.mxu0 0.0
        %309 = vmatpush1.msra.mxu0 %v281
        %310 = vmatprep.subr.mxu0 0.0
        %311 = vmatpush1.msra.mxu0 %v282
        %312 = vmatprep.subr.mxu0 0.0
        %313 = vmatpush1.msra.mxu0 %v283
        %314 = vmatprep.subr.mxu0 0.0
        %315 = vmatpush1.msra.mxu0 0.0
        %316 = vmatprep.subr.mxu0 0.0
        %317 = vmatpush1.msra.mxu0 0.0
        %318 = vmatprep.subr.mxu0 0.0
        %319 = vmatpush1.msra.mxu0 0.0
        %320 = vmatprep.subr.mxu0 0.0
        %321 = vmatpush1.msra.mxu0 0.0
        %322 = vmatprep.subr.mxu0 0.0
        %323 = vmatpush1.msra.mxu0 0.0
        %324 = vmatprep.subr.mxu0 0.0
        %325 = vmatpush1.msra.mxu0 0.0
        %326 = vmatprep.subr.mxu0 0.0
        %327 = vmatpush1.msra.mxu0 0.0
        %328 = vmatprep.subr.mxu0 0.0
        %329 = vmatpush1.msra.mxu0 0.0
        %330 = vmatprep.subr.mxu0 0.0
        %331 = vmatpush1.msra.mxu0 0.0
        %332 = vmatprep.subr.mxu0 0.0
        %333 = vmatpush1.msra.mxu0 0.0
        %334 = vmatprep.subr.mxu0 0.0
        %335 = vmatpush1.msra.mxu0 0.0
        %336 = vmatprep.subr.mxu0 0.0
        %337 = vmatpush1.msra.mxu0 0.0
        %338 = vmatprep.subr.mxu0 0.0
        %339 = vmatpush1.msra.mxu0 0.0
        %340 = vmatprep.subr.mxu0 0.0
        %341 = vmatpush1.msra.mxu0 0.0
        %342 = vmatprep.subr.mxu0 0.0
        %343 = vmatpush1.msra.mxu0 0.0
        %344 = vmatprep.subr.mxu0 0.0
        %345 = vmatpush1.msra.mxu0 0.0
        %346 = vmatprep.subr.mxu0 0.0
        %347 = vmatpush1.msra.mxu0 0.0
        %348 = vmatprep.subr.mxu0 0.0
        %349 = vmatpush1.msra.mxu0 0.0
        %350 = vmatprep.subr.mxu0 0.0
        %351 = vmatpush1.msra.mxu0 0.0
        %352 = vmatprep.subr.mxu0 0.0
        %353 = vmatpush1.msra.mxu0 0.0
        %354 = vmatprep.subr.mxu0 0.0
        %355 = vmatpush1.msra.mxu0 0.0
        %356 = vmatprep.subr.mxu0 0.0
        %357 = vmatpush1.msra.mxu0 0.0
        %358 = vmatprep.subr.mxu0 0.0
        %359 = vmatpush1.msra.mxu0 0.0
        %360 = vmatprep.subr.mxu0 0.0
        %361 = vmatpush1.msra.mxu0 0.0
        %362 = vmatprep.mubr.f32.mxu0 0.0
        %363 = vmatmul.mubr.f32.gmra.mrb[0].mxu0 %v293
        %v364 = vpop.f32.mrb[0].mxu0
        %v365 = vadd.f32 %v289, %v364
        %v366 = vpop.f32.mrb[0].mxu0
        %367 = vmatprep.mubr.f32.mxu0 0.0
        %368 = vmatmul.mubr.f32.gmra.mrb[0].mxu0 %v296
        %v369 = vpop.f32.mrb[0].mxu0
        %v370 = vadd.f32 %v289, %v369
        %v371 = vpop.f32.mrb[0].mxu0
        %372 = vdwg.mxu0
        %v373 = vmax.f32 %v365, 0.0
        %v374 = vmax.f32 %v370, 0.0
        %v375 = vld [vmem:[#allocation7] sm:$0xff]
        %v376 = vld [vmem:[#allocation7 + $0x8] sm:$0xff]
        %v377 = vld [vmem:[#allocation7 + $0x10] sm:$0xff]
        %v378 = vld [vmem:[#allocation7 + $0x18] sm:$0xff]
        %v379 = vld [vmem:[#allocation7 + $0x20] sm:$0xff]
        %v380 = vld [vmem:[#allocation7 + $0x28] sm:$0xff]
        %v381 = vld [vmem:[#allocation7 + $0x30] sm:$0xff]
        %v382 = vld [vmem:[#allocation7 + $0x38] sm:$0xff]
        %v383 = vld [vmem:[#allocation7 + $0x40] sm:$0xff]
        %v384 = vld [vmem:[#allocation7 + $0x48] sm:$0xff]
        %v385 = vld [vmem:[#allocation7 + $0x50] sm:$0xff]
        %v386 = vld [vmem:[#allocation7 + $0x58] sm:$0xff]
        %v387 = vld [vmem:[#allocation7 + $0x60] sm:$0xff]
        %v388 = vld [vmem:[#allocation7 + $0x68] sm:$0xff]
        %v389 = vld [vmem:[#allocation7 + $0x70] sm:$0xff]
        %v390 = vld [vmem:[#allocation7 + $0x78] sm:$0xff]
        %v391 = vld [vmem:[%s4] sm:$0x1]
        %v393 = vlaneseq
        %v394 = vshrl.u32 %v393, 7
        %v395 = vsub.s32 0, %v394
        %v396 = vrot.slane %v391, %v395
        %398 = vmatprep.subr.mxu0 0.0
        %399 = vmatpush1.msra.mxu0 %v375
        %400 = vmatprep.subr.mxu0 0.0
        %401 = vmatpush1.msra.mxu0 %v376
        %402 = vmatprep.subr.mxu0 0.0
        %403 = vmatpush1.msra.mxu0 %v377
        %404 = vmatprep.subr.mxu0 0.0
        %405 = vmatpush1.msra.mxu0 %v378
        %406 = vmatprep.subr.mxu0 0.0
        %407 = vmatpush1.msra.mxu0 %v379
        %408 = vmatprep.subr.mxu0 0.0
        %409 = vmatpush1.msra.mxu0 %v380
        %410 = vmatprep.subr.mxu0 0.0
        %411 = vmatpush1.msra.mxu0 %v381
        %412 = vmatprep.subr.mxu0 0.0
        %413 = vmatpush1.msra.mxu0 %v382
        %414 = vmatprep.subr.mxu0 0.0
        %415 = vmatpush1.msra.mxu0 %v383
        %416 = vmatprep.subr.mxu0 0.0
        %417 = vmatpush1.msra.mxu0 %v384
        %418 = vmatprep.subr.mxu0 0.0
        %419 = vmatpush1.msra.mxu0 %v385
        %420 = vmatprep.subr.mxu0 0.0
        %421 = vmatpush1.msra.mxu0 %v386
        %422 = vmatprep.subr.mxu0 0.0
        %423 = vmatpush1.msra.mxu0 %v387
        %424 = vmatprep.subr.mxu0 0.0
        %425 = vmatpush1.msra.mxu0 %v388
        %426 = vmatprep.subr.mxu0 0.0
        %427 = vmatpush1.msra.mxu0 %v389
        %428 = vmatprep.subr.mxu0 0.0
        %429 = vmatpush1.msra.mxu0 %v390
        %430 = vmatprep.subr.mxu0 0.0
        %431 = vmatpush1.msra.mxu0 0.0
        %432 = vmatprep.subr.mxu0 0.0
        %433 = vmatpush1.msra.mxu0 0.0
        %434 = vmatprep.subr.mxu0 0.0
        %435 = vmatpush1.msra.mxu0 0.0
        %436 = vmatprep.subr.mxu0 0.0
        %437 = vmatpush1.msra.mxu0 0.0
        %438 = vmatprep.subr.mxu0 0.0
        %439 = vmatpush1.msra.mxu0 0.0
        %440 = vmatprep.subr.mxu0 0.0
        %441 = vmatpush1.msra.mxu0 0.0
        %442 = vmatprep.subr.mxu0 0.0
        %443 = vmatpush1.msra.mxu0 0.0
        %444 = vmatprep.subr.mxu0 0.0
        %445 = vmatpush1.msra.mxu0 0.0
        %446 = vmatprep.subr.mxu0 0.0
        %447 = vmatpush1.msra.mxu0 0.0
        %448 = vmatprep.subr.mxu0 0.0
        %449 = vmatpush1.msra.mxu0 0.0
        %450 = vmatprep.subr.mxu0 0.0
        %451 = vmatpush1.msra.mxu0 0.0
        %452 = vmatprep.subr.mxu0 0.0
        %453 = vmatpush1.msra.mxu0 0.0
        %454 = vmatprep.subr.mxu0 0.0
        %455 = vmatpush1.msra.mxu0 0.0
        %456 = vmatprep.subr.mxu0 0.0
        %457 = vmatpush1.msra.mxu0 0.0
        %458 = vmatprep.subr.mxu0 0.0
        %459 = vmatpush1.msra.mxu0 0.0
        %460 = vmatprep.subr.mxu0 0.0
        %461 = vmatpush1.msra.mxu0 0.0
        %462 = vmatprep.mubr.f32.mxu0 0.0
        %463 = vmatmul.mubr.f32.gmra.mrb[0].mxu0 %v373
        %v464 = vpop.f32.mrb[0].mxu0
        %v465 = vadd.f32 %v396, %v464
        %v466 = vpop.f32.mrb[0].mxu0
        %467 = vmatprep.mubr.f32.mxu0 0.0
        %468 = vmatmul.mubr.f32.gmra.mrb[0].mxu0 %v374
        %v469 = vpop.f32.mrb[0].mxu0
        %v470 = vadd.f32 %v396, %v469
        %v471 = vpop.f32.mrb[0].mxu0
        %472 = vdwg.mxu0
        %v473 = vmax.f32 %v465, 0.0
        %v474 = vmax.f32 %v470, 0.0
        %475 = vst [vmem:[%s271] sm:$0xff] %v473
        %476 = vst [vmem:[%s271 + $0x8] sm:$0xff] %v474
        %s477 = sand.u32 %s141, 1
        %s478 = scalar_lea.sflag [#allocation4], %s477
        %s479 = sand.u32 %s141, 1
        %s480 = smul.addr %s479, 16
        %s481 = scalar_lea.vmem [#allocation8], %s480
        // Predicated region
        $region53: #{tpu_custom_call.1} parent=39 // pred_check
          %p482 = pneg %p151
        $region54: #{tpu_custom_call.1} parent=39 // pred_check_branch
          %484 = sbr.rel (%p482) target = $region56
        $region55: #{tpu_custom_call.1} parent=39 // pred_region
          %s485 = smul.u32 2, %s23
          %s487 = ssub.s32 256, 256
          %488 = vsyncadd %s478, %s487
          %s489 = smul.addr %s485, 128
          %s490 = scalar_lea.hbm %s5, %s489
          %s491 = sshll.u32 %s481, 4
          %s492 = int_to_ptr.vmem [resolvable:$true] %s491
          %497 = dma.vmem_to_hbm [thread:$0]  %s492, 256, %s490, %s478, 128, 128, 8
        $region56: #{tpu_custom_call.1} parent=39 // pred_fallthru
          _
      $region40: #{tpu_custom_call.1} parent=5 // pred_fallthru
        _
      %p498 = scmp.le.s32.totalorder 2, %s18
      // Predicated region
      $region57: #{tpu_custom_call.1} parent=5 // pred_check
        %p499 = pneg %p498
      $region58: #{tpu_custom_call.1} parent=5 // pred_check_branch
        %501 = sbr.rel (%p499) target = $region60
      $region59: #{tpu_custom_call.1} parent=5 // pred_region
        %s502 = ssub.s32 %s18, 2
        // Predicated region
        $region61: #{tpu_custom_call.1} parent=59 // pred_check
          %p503 = pneg %p157
        $region62: #{tpu_custom_call.1} parent=59 // pred_check_branch
          %505 = sbr.rel (%p503) target = $region64
        $region63: #{tpu_custom_call.1} parent=59 // pred_region
          %s506 = sand.u32 %s142, 1
          %s507 = scalar_lea.sflag [#allocation4], %s506
          %s508 = sand.u32 %s142, 1
          %s509 = smul.addr %s508, 16
          %s510 = scalar_lea.vmem [#allocation8], %s509
          %511 = dma.done %s507, 256
        $region64: #{tpu_custom_call.1} parent=59 // pred_fallthru
          _
      $region60: #{tpu_custom_call.1} parent=5 // pred_fallthru
        _
    $region6: #{tpu_custom_call.1} parent=1 // loop_footer
      %s22 = sadd.s32 1, %s18
    $region7: #{tpu_custom_call.1} parent=1 // loop_footer_branch
      %17 = sbr.rel target = $region3
    $region8: #{tpu_custom_call.1} parent=1 // loop_exit
      _
    %512 = vsyncpa [#allocation3], 1
    %s513 = scalar_lea.sflag [#allocation3], 1
    %514 = vsyncpa %s513, 1
    %515 = vsyncpa [#allocation6], 1
    %516 = vsyncpa [#allocation4], 1
    %s517 = scalar_lea.sflag [#allocation4], 1
    %518 = vsyncpa %s517, 1

</llo_original>
